<compile_context>
chip_gen: v7x
topology: tpu7x:2x2x1
jax: 0.10.0
libtpu: 0.0.40
codegen_flags: <defaults>
</compile_context>

<pallas_src>
import jax
import jax.numpy as jnp
from jax.experimental import pallas as pl
from jax.experimental.pallas import tpu as pltpu

# Finite "-inf" for padded class lanes: exp underflows to exactly 0 and padded lanes
# can never win the row max (assumes real logits never approach -1e30).
NEG_LARGE = -1e30


def mlp_kernel(x_ref, w1_ref, b1_ref, w2_ref, b2_ref, w3_ref, b3_ref, o_ref):
    # x streamed as f32; cast to bf16 on the VPU (free under MXU slack).
    x = x_ref[...].astype(jnp.bfloat16)
    # fc1 + ReLU (bf16 operands, f32 accumulate, f32 elementwise)
    h1 = jnp.dot(x, w1_ref[...], preferred_element_type=jnp.float32)
    h1 = jnp.maximum(h1 + b1_ref[...], 0.0)
    # fc2 + ReLU
    h2 = jnp.dot(h1.astype(jnp.bfloat16), w2_ref[...],
                 preferred_element_type=jnp.float32)
    h2 = jnp.maximum(h2 + b2_ref[...], 0.0)
    # fc3 (class dim padded to 128 lanes; padded lanes carry NEG_LARGE bias)
    logits = jnp.dot(h2.astype(jnp.bfloat16), w3_ref[...],
                     preferred_element_type=jnp.float32)
    logits = logits + b3_ref[...]
    # Numerically stable softmax over the class axis; padded lanes contribute 0.
    m = jnp.max(logits, axis=-1, keepdims=True)
    e = jnp.exp(logits - m)
    denom = jnp.sum(e, axis=-1, keepdims=True)
    # Exact f32 divide -> rows sum to 1 (approx reciprocal caused ~1e-3 row-sum error).
    o_ref[...] = (e / denom).astype(o_ref.dtype)


def prepare_params(w1, b1, w2, b2, w3, b3):
    """One-time parameter prep (hoisted out of the per-call hot path)."""
    H = w1.shape[1]
    C = w3.shape[1]
    C_pad = pl.cdiv(C, 128) * 128  # lane-dense output -> unmasked vst
    w1_b = w1.astype(jnp.bfloat16)
    w2_b = w2.astype(jnp.bfloat16)
    w3_b = jnp.zeros((H, C_pad), jnp.bfloat16).at[:, :C].set(w3.astype(jnp.bfloat16))
    b1_p = b1.reshape(1, -1).astype(jnp.float32)
    b2_p = b2.reshape(1, -1).astype(jnp.float32)
    b3_p = jnp.full((1, C_pad), NEG_LARGE, jnp.float32).at[:, :C].set(
        b3.reshape(1, -1).astype(jnp.float32))
    return (w1_b, b1_p, w2_b, b2_p, w3_b, b3_p), C


def mlp_forward(x, prepared, num_classes, *, block_b=None):
    w1_b, b1, w2_b, b2, w3_b, b3_p = prepared
    B, F = x.shape
    H = w1_b.shape[1]
    C_pad = w3_b.shape[1]

    if block_b is None:
        # Large tiles amortize per-step pipeline overhead and fill the MXU (M >= 256
        # on v6e/v7x when the batch allows), while keeping >= 2 grid steps so v7x's
        # two TensorCores both get work.  Sublane dim must be a multiple of 8.
        if B >= 16:
            block_b = min(1024, max(8, (B // 2 // 8) * 8))
        else:
            block_b = max(8, B)

    B_pad = pl.cdiv(B, block_b) * block_b
    # TODO(synk): for ragged batches, a masked last-tile store would avoid this pad.
    x_p = x if B_pad == B else jnp.pad(x, ((0, B_pad - B), (0, 0)))
    x_p = x_p.astype(jnp.float32)

    cost = pl.CostEstimate(
        flops=2 * B_pad * (F * H + H * H + H * C_pad),
        transcendentals=B_pad * C_pad,
        bytes_accessed=(x_p.size * 4 + w1_b.size * 2 + w2_b.size * 2 + w3_b.size * 2
                        + b1.size * 4 + b2.size * 4 + b3_p.size * 4
                        + B_pad * C_pad * 4),
    )

    out = pl.pallas_call(
        mlp_kernel,
        out_shape=jax.ShapeDtypeStruct((B_pad, C_pad), jnp.float32),
        grid=(B_pad // block_b,),
        in_specs=[
            pl.BlockSpec((block_b, F), lambda i: (i, 0)),  # x tile streams per step
            pl.BlockSpec((F, H), lambda i: (0, 0)),        # weights/biases: constant
            pl.BlockSpec((1, H), lambda i: (0, 0)),        # index_map -> VMEM-resident,
            pl.BlockSpec((H, H), lambda i: (0, 0)),        # never re-DMA'd
            pl.BlockSpec((1, H), lambda i: (0, 0)),
            pl.BlockSpec((H, C_pad), lambda i: (0, 0)),
            pl.BlockSpec((1, C_pad), lambda i: (0, 0)),
        ],
        out_specs=pl.BlockSpec((block_b, C_pad), lambda i: (i, 0)),
        compiler_params=pltpu.CompilerParams(
            dimension_semantics=("parallel",),  # batch axis shards across v7x's 2 TCs
        ),
        cost_estimate=cost,
    )(x_p, w1_b, b1, w2_b, b2, w3_b, b3_p)

    return out[:B, :num_classes]


def init_params(key, input_size, hidden_size, output_size):
    # Deterministic init mimicking nn.Linear's uniform(-1/sqrt(fan_in), 1/sqrt(fan_in)).
    ks = jax.random.split(key, 6)

    def linear(kw, kb, fan_in, fan_out):
        bound = 1.0 / jnp.sqrt(fan_in)
        # stored as [in, out] (transpose of PyTorch's [out, in])
        w = jax.random.uniform(kw, (fan_in, fan_out), jnp.float32, -bound, bound)
        b = jax.random.uniform(kb, (1, fan_out), jnp.float32, -bound, bound)
        return w, b

    w1, b1 = linear(ks[0], ks[1], input_size, hidden_size)
    w2, b2 = linear(ks[2], ks[3], hidden_size, hidden_size)
    w3, b3 = linear(ks[4], ks[5], hidden_size, output_size)
    return w1, b1, w2, b2, w3, b3


if __name__ == "__main__":
    # Shapes consistent with the module: concatenated features -> 128 -> 128 -> num_classes.
    # Batch chosen so the 1-D batch grid has 2 tiles (exercises pipelining / 2 TCs).
    batch = 256
    input_size = 256      # stand-in for resnet+vit+clip+dino feature concat
    hidden_size = 128
    output_size = 10      # stand-in for len(np.unique(labels))

    key = jax.random.PRNGKey(0)
    kx, kp = jax.random.split(key)
    x = jax.random.normal(kx, (batch, input_size), dtype=jnp.float32)
    raw_params = init_params(kp, input_size, hidden_size, output_size)

    prepared, num_classes = prepare_params(*raw_params)

    out = mlp_forward(x, prepared, num_classes)
    out = jax.block_until_ready(out)
    assert out.shape == (batch, output_size)

    # Reference in plain JAX with the same bf16 matmul-operand casts / f32 accumulation.
    w1, b1, w2, b2, w3, b3 = raw_params
    h = jnp.maximum(jnp.dot(x.astype(jnp.bfloat16), w1.astype(jnp.bfloat16),
                            preferred_element_type=jnp.float32) + b1, 0.0)
    h = jnp.maximum(jnp.dot(h.astype(jnp.bfloat16), w2.astype(jnp.bfloat16),
                            preferred_element_type=jnp.float32) + b2, 0.0)
    logits = jnp.dot(h.astype(jnp.bfloat16), w3.astype(jnp.bfloat16),
                     preferred_element_type=jnp.float32) + b3
    ref = jax.nn.softmax(logits, axis=1)

    assert jnp.allclose(out, ref, atol=2e-3, rtol=2e-3), float(jnp.max(jnp.abs(out - ref)))
    # Exact divide in the kernel -> rows sum to 1 to f32 precision.
    assert jnp.allclose(jnp.sum(out, axis=1), 1.0, atol=1e-4)

    print("KERNEL_OK")
</pallas_src>

<mosaic_0001>
module attributes {stable_mosaic.version = 11 : i64} {
  func.func @mlp_kernel(%arg0: i32, %arg1: memref<128x256xf32, #tpu.memory_space<vmem>>, %arg2: memref<256x128xbf16, #tpu.memory_space<vmem>>, %arg3: memref<1x128xf32, #tpu.memory_space<vmem>>, %arg4: memref<128x128xbf16, #tpu.memory_space<vmem>>, %arg5: memref<1x128xf32, #tpu.memory_space<vmem>>, %arg6: memref<128x128xbf16, #tpu.memory_space<vmem>>, %arg7: memref<1x128xf32, #tpu.memory_space<vmem>>, %arg8: memref<128x128xf32, #tpu.memory_space<vmem>>) attributes {dimension_semantics = [#tpu.dimension_semantics<parallel>], iteration_bounds = array<i64: 2>, scalar_prefetch = 0 : i64, scratch_operands = 0 : i64, tpu.core_type = #tpu.core_type<tc>, window_params = [{transform_indices = @transform_0, window_bounds = array<i64: 128, 256>}, {pipeline_mode = #tpu.pipeline_mode<synchronous>, transform_indices = @transform_1, window_bounds = array<i64: 256, 128>}, {pipeline_mode = #tpu.pipeline_mode<synchronous>, transform_indices = @transform_2, window_bounds = array<i64: 1, 128>}, {pipeline_mode = #tpu.pipeline_mode<synchronous>, transform_indices = @transform_3, window_bounds = array<i64: 128, 128>}, {pipeline_mode = #tpu.pipeline_mode<synchronous>, transform_indices = @transform_4, window_bounds = array<i64: 1, 128>}, {pipeline_mode = #tpu.pipeline_mode<synchronous>, transform_indices = @transform_5, window_bounds = array<i64: 128, 128>}, {pipeline_mode = #tpu.pipeline_mode<synchronous>, transform_indices = @transform_6, window_bounds = array<i64: 1, 128>}, {transform_indices = @transform_7, window_bounds = array<i64: 128, 128>}]} {
    %c0 = arith.constant 0 : index
    %c0_0 = arith.constant 0 : index
    %0 = vector.load %arg1[%c0, %c0_0] : memref<128x256xf32, #tpu.memory_space<vmem>>, vector<128x256xf32>
    %1 = arith.truncf %0 : vector<128x256xf32> to vector<128x256xbf16>
    %c0_1 = arith.constant 0 : index
    %c0_2 = arith.constant 0 : index
    %2 = vector.load %arg2[%c0_1, %c0_2] : memref<256x128xbf16, #tpu.memory_space<vmem>>, vector<256x128xbf16>
    %cst = arith.constant dense<0.000000e+00> : vector<128x128xf32>
    %3 = tpu.matmul %1, %2, %cst {dimension_numbers = #tpu.dot_dimension_numbers<[1], [0], [0], [1], [0, 0, 1, 1], [], []>} : vector<128x256xbf16>, vector<256x128xbf16>, vector<128x128xf32> -> vector<128x128xf32>
    %c0_3 = arith.constant 0 : index
    %c0_4 = arith.constant 0 : index
    %4 = vector.load %arg3[%c0_3, %c0_4] : memref<1x128xf32, #tpu.memory_space<vmem>>, vector<1x128xf32>
    %5 = vector.broadcast %4 : vector<1x128xf32> to vector<128x128xf32>
    %6 = arith.addf %3, %5 : vector<128x128xf32>
    %cst_5 = arith.constant 0.000000e+00 : f32
    %7 = vector.broadcast %cst_5 : f32 to vector<128x128xf32>
    %8 = arith.maximumf %6, %7 : vector<128x128xf32>
    %9 = arith.truncf %8 : vector<128x128xf32> to vector<128x128xbf16>
    %c0_6 = arith.constant 0 : index
    %c0_7 = arith.constant 0 : index
    %10 = vector.load %arg4[%c0_6, %c0_7] : memref<128x128xbf16, #tpu.memory_space<vmem>>, vector<128x128xbf16>
    %cst_8 = arith.constant dense<0.000000e+00> : vector<128x128xf32>
    %11 = tpu.matmul %9, %10, %cst_8 {dimension_numbers = #tpu.dot_dimension_numbers<[1], [0], [0], [1], [0, 0, 1, 1], [], []>} : vector<128x128xbf16>, vector<128x128xbf16>, vector<128x128xf32> -> vector<128x128xf32>
    %c0_9 = arith.constant 0 : index
    %c0_10 = arith.constant 0 : index
    %12 = vector.load %arg5[%c0_9, %c0_10] : memref<1x128xf32, #tpu.memory_space<vmem>>, vector<1x128xf32>
    %13 = vector.broadcast %12 : vector<1x128xf32> to vector<128x128xf32>
    %14 = arith.addf %11, %13 : vector<128x128xf32>
    %cst_11 = arith.constant 0.000000e+00 : f32
    %15 = vector.broadcast %cst_11 : f32 to vector<128x128xf32>
    %16 = arith.maximumf %14, %15 : vector<128x128xf32>
    %17 = arith.truncf %16 : vector<128x128xf32> to vector<128x128xbf16>
    %c0_12 = arith.constant 0 : index
    %c0_13 = arith.constant 0 : index
    %18 = vector.load %arg6[%c0_12, %c0_13] : memref<128x128xbf16, #tpu.memory_space<vmem>>, vector<128x128xbf16>
    %cst_14 = arith.constant dense<0.000000e+00> : vector<128x128xf32>
    %19 = tpu.matmul %17, %18, %cst_14 {dimension_numbers = #tpu.dot_dimension_numbers<[1], [0], [0], [1], [0, 0, 1, 1], [], []>} : vector<128x128xbf16>, vector<128x128xbf16>, vector<128x128xf32> -> vector<128x128xf32>
    %c0_15 = arith.constant 0 : index
    %c0_16 = arith.constant 0 : index
    %20 = vector.load %arg7[%c0_15, %c0_16] : memref<1x128xf32, #tpu.memory_space<vmem>>, vector<1x128xf32>
    %21 = vector.broadcast %20 : vector<1x128xf32> to vector<128x128xf32>
    %22 = arith.addf %19, %21 : vector<128x128xf32>
    %cst_17 = arith.constant dense<0xFF800000> : vector<128xf32>
    %23 = vector.multi_reduction <maximumf>, %22, %cst_17 [1] : vector<128x128xf32> to vector<128xf32>
    %24 = vector.shape_cast %23 : vector<128xf32> to vector<128x1xf32>
    %25 = vector.broadcast %24 : vector<128x1xf32> to vector<128x128xf32>
    %26 = arith.subf %22, %25 : vector<128x128xf32>
    %27 = math.exp %26 : vector<128x128xf32>
    %cst_18 = arith.constant dense<0.000000e+00> : vector<128xf32>
    %28 = vector.multi_reduction <add>, %27, %cst_18 [1] : vector<128x128xf32> to vector<128xf32>
    %29 = vector.shape_cast %28 : vector<128xf32> to vector<128x1xf32>
    %30 = vector.broadcast %29 : vector<128x1xf32> to vector<128x128xf32>
    %31 = arith.divf %27, %30 : vector<128x128xf32>
    %c0_19 = arith.constant 0 : index
    %c0_20 = arith.constant 0 : index
    %32 = vector.load %arg8[%c0_19, %c0_20] : memref<128x128xf32, #tpu.memory_space<vmem>>, vector<128x128xf32>
    tpu.vector_store %arg8[%c0_19, %c0_20], %31 {strides = array<i32>} : memref<128x128xf32, #tpu.memory_space<vmem>>, vector<128x128xf32>,
    return
  }
  func.func @transform_0(%arg0: i32) -> (i32, i32) {
    %c0_i32 = arith.constant 0 : i32
    %c0_i32_0 = arith.constant 0 : i32
    return %arg0, %c0_i32 : i32, i32
  }
  func.func @transform_1(%arg0: i32) -> (i32, i32) {
    %c0_i32 = arith.constant 0 : i32
    %c0_i32_0 = arith.constant 0 : i32
    %c0_i32_1 = arith.constant 0 : i32
    return %c0_i32, %c0_i32_0 : i32, i32
  }
  func.func @transform_2(%arg0: i32) -> (i32, i32) {
    %c0_i32 = arith.constant 0 : i32
    %c0_i32_0 = arith.constant 0 : i32
    %c0_i32_1 = arith.constant 0 : i32
    return %c0_i32, %c0_i32_0 : i32, i32
  }
  func.func @transform_3(%arg0: i32) -> (i32, i32) {
    %c0_i32 = arith.constant 0 : i32
    %c0_i32_0 = arith.constant 0 : i32
    %c0_i32_1 = arith.constant 0 : i32
    return %c0_i32, %c0_i32_0 : i32, i32
  }
  func.func @transform_4(%arg0: i32) -> (i32, i32) {
    %c0_i32 = arith.constant 0 : i32
    %c0_i32_0 = arith.constant 0 : i32
    %c0_i32_1 = arith.constant 0 : i32
    return %c0_i32, %c0_i32_0 : i32, i32
  }
  func.func @transform_5(%arg0: i32) -> (i32, i32) {
    %c0_i32 = arith.constant 0 : i32
    %c0_i32_0 = arith.constant 0 : i32
    %c0_i32_1 = arith.constant 0 : i32
    return %c0_i32, %c0_i32_0 : i32, i32
  }
  func.func @transform_6(%arg0: i32) -> (i32, i32) {
    %c0_i32 = arith.constant 0 : i32
    %c0_i32_0 = arith.constant 0 : i32
    %c0_i32_1 = arith.constant 0 : i32
    return %c0_i32, %c0_i32_0 : i32, i32
  }
  func.func @transform_7(%arg0: i32) -> (i32, i32) {
    %c0_i32 = arith.constant 0 : i32
    %c0_i32_0 = arith.constant 0 : i32
    return %arg0, %c0_i32 : i32, i32
  }
}

</mosaic_0001>

<llo_original>
// kernel: tpu_custom_call.1
$region0: #{tpu_custom_call.1}
  #allocation0 [shape = 'u32[]', space=smem, size = 0x4, offset = 0x4, fixed_abs, tag = 'smem constant byte address 0x4 - core index']
  #allocation1 [shape = 'u32[144,128]{1,0:T(1,128)}', space=vmem, size = 0x12000, scoped, tag = 'internal scratch']
  %s0 = inlined_call_operand.hbm [shape: f32[256,256], index: 0, kind: input, shape index: {}]
  %s1 = inlined_call_operand.hbm [shape: bf16[256,128], index: 1, kind: input, shape index: {}]
  %s2 = inlined_call_operand.vmem [shape: f32[1,128], index: 2, kind: input, shape index: {}]
  %s3 = inlined_call_operand.hbm [shape: bf16[128,128], index: 3, kind: input, shape index: {}]
  %s4 = inlined_call_operand.vmem [shape: f32[1,128], index: 4, kind: input, shape index: {}]
  %s5 = inlined_call_operand.hbm [shape: bf16[128,128], index: 5, kind: input, shape index: {}]
  %s6 = inlined_call_operand.vmem [shape: f32[1,128], index: 6, kind: input, shape index: {}]
  %s7 = inlined_call_operand.hbm [shape: f32[256,128], index: 7, kind: output, shape index: {}]
  %s8 = sld [smem:[#allocation0]]
  $region77: #{tpu_custom_call.1} parent=0
    _
  %s10 = ssub.s32 1, %s8
  %s11 = scalar_select 0, %s10, %s8
  $region1: #{tpu_custom_call.1} parent=0
    #allocation2 [shape = 'u8[262144]{0}', space=vmem, size = 0x40000, scoped, tag = 'input window, operand 0']
    #allocation3 [shape = 's32[2]{0}', space=sflag, size = 0x8, scoped, tag = 'scoped memory for tpu_custom_call.1']
    #allocation4 [shape = 's32[2]{0}', space=sflag, size = 0x8, scoped, tag = 'scoped memory for tpu_custom_call.1']
    #allocation5 [shape = 'u8[65536]{0}', space=vmem, size = 0x10000, scoped, tag = 'input window, operand 1, single buffered']
    #allocation6 [shape = 's32[1]{0}', space=sflag, size = 0x4, scoped, tag = 'scoped memory for tpu_custom_call.1']
    #allocation7 [shape = 'u8[32768]{0}', space=vmem, size = 0x8000, scoped, tag = 'input window, operand 3, single buffered']
    #allocation8 [shape = 'u8[32768]{0}', space=vmem, size = 0x8000, scoped, tag = 'input window, operand 5, single buffered']
    #allocation9 [shape = 's32[1]{0}', space=sflag, size = 0x4, scoped, tag = 'scoped memory for tpu_custom_call.1']
    #allocation10 [shape = 'u8[131072]{0}', space=vmem, size = 0x20000, scoped, tag = 'output window, operand 0']
    %12 = vsyncpa [#allocation3], 0
    %s13 = scalar_lea.sflag [#allocation3], 1
    %14 = vsyncpa %s13, 0
    %15 = vsyncpa [#allocation6], 0
    %16 = vsyncpa [#allocation9], 0
    %17 = vsyncpa [#allocation4], 0
    %s18 = scalar_lea.sflag [#allocation4], 1
    %19 = vsyncpa %s18, 0
    loop: start=0, step=1, limit=4
    $region2: #{tpu_custom_call.1} parent=1 // loop_pre_header
      _
    $region3: #{tpu_custom_call.1} parent=1 // loop_header
      %s21 = sphi 0, %s25
      %p22 = scmp.ge.s32.totalorder %s21, 4
      %s31 = sphi 0, %s33
      %s34 = sphi 0, %s31
      %s35 = sphi 0, %s34
      %s51 = sphi 0, %s35
      %s55 = sphi 0, %s55
      %s57 = sphi 0, %s55
      %s58 = sphi 0, %s57
      %s72 = sphi 0, %s58
      %s76 = sphi 0, %s76
      %s78 = sphi 0, %s76
      %s79 = sphi 0, %s78
      %s93 = sphi 0, %s79
      %s97 = sphi 0, %s97
      %s99 = sphi 0, %s97
      %s100 = sphi 0, %s99
      %s114 = sphi 0, %s100
      %s118 = sphi 0, %s118
      %s120 = sphi 0, %s118
      %s121 = sphi 0, %s120
      %s135 = sphi 0, %s121
      %s139 = sphi 0, %s139
      %s141 = sphi 0, %s139
      %s142 = sphi 0, %s141
      %s156 = sphi 0, %s142
      %s160 = sphi 0, %s160
      %s162 = sphi 0, %s160
      %s163 = sphi 0, %s162
      %s177 = sphi 0, %s163
      %s183 = sphi 0, %s185
      %s186 = sphi 0, %s183
      %s187 = sphi 0, %s186
      %s203 = sphi 0, %s187
    $region4: #{tpu_custom_call.1} parent=1 // loop_header_branch
      %24 = sbr.rel (%p22) target = $region8
    $region5: #{tpu_custom_call.1} parent=1 // loop_body
      %s26 = ssub.s32 %s21, 1
      %s27 = ssub.s32 %s21, 2
      %s28 = sadd.s32 %s21, 1
      %s29 = ssub.s32 %s21, %s28
      %p30 = scmp.eq.s32.totalorder %s29, 0
      %s32 = sadd.s32 %s31, 1
      %s33 = scalar_select %p30, %s31, %s32
      %p36 = pneg %p30
      %p37 = scmp.eq.s32.totalorder %s21, 1
      %p38 = por %p36, %p37
      %p39 = scmp.ne.s32.totalorder %s31, %s34
      %p40 = scmp.eq.s32.totalorder %s21, 0
      %p41 = por %p39, %p40
      %p42 = scmp.ne.s32.totalorder %s31, %s34
      %p43 = scmp.eq.s32.totalorder %s26, 1
      %p44 = por %p42, %p43
      %p45 = scmp.ne.s32.totalorder %s34, %s35
      %p46 = scmp.eq.s32.totalorder %s26, 0
      %p47 = por %p45, %p46
      %p48 = scmp.ne.s32.totalorder %s34, %s35
      %p49 = scmp.eq.s32.totalorder %s27, 1
      %p50 = por %p48, %p49
      %p52 = scmp.ne.s32.totalorder %s35, %s51
      %p53 = scmp.eq.s32.totalorder %s27, 0
      %p54 = por %p52, %p53
      %s56 = sadd.s32 %s55, 1
      %p59 = scmp.eq.s32.totalorder %s21, 1
      %p60 = scmp.ne.s32.totalorder %s55, %s57
      %p61 = scmp.eq.s32.totalorder %s21, 0
      %p62 = por %p60, %p61
      %p63 = scmp.ne.s32.totalorder %s55, %s57
      %p64 = scmp.eq.s32.totalorder %s26, 1
      %p65 = por %p63, %p64
      %p66 = scmp.ne.s32.totalorder %s57, %s58
      %p67 = scmp.eq.s32.totalorder %s26, 0
      %p68 = por %p66, %p67
      %p69 = scmp.ne.s32.totalorder %s57, %s58
      %p70 = scmp.eq.s32.totalorder %s27, 1
      %p71 = por %p69, %p70
      %p73 = scmp.ne.s32.totalorder %s58, %s72
      %p74 = scmp.eq.s32.totalorder %s27, 0
      %p75 = por %p73, %p74
      %s77 = sadd.s32 %s76, 1
      %p80 = scmp.eq.s32.totalorder %s21, 1
      %p81 = scmp.ne.s32.totalorder %s76, %s78
      %p82 = scmp.eq.s32.totalorder %s21, 0
      %p83 = por %p81, %p82
      %p84 = scmp.ne.s32.totalorder %s76, %s78
      %p85 = scmp.eq.s32.totalorder %s26, 1
      %p86 = por %p84, %p85
      %p87 = scmp.ne.s32.totalorder %s78, %s79
      %p88 = scmp.eq.s32.totalorder %s26, 0
      %p89 = por %p87, %p88
      %p90 = scmp.ne.s32.totalorder %s78, %s79
      %p91 = scmp.eq.s32.totalorder %s27, 1
      %p92 = por %p90, %p91
      %p94 = scmp.ne.s32.totalorder %s79, %s93
      %p95 = scmp.eq.s32.totalorder %s27, 0
      %p96 = por %p94, %p95
      %s98 = sadd.s32 %s97, 1
      %p101 = scmp.eq.s32.totalorder %s21, 1
      %p102 = scmp.ne.s32.totalorder %s97, %s99
      %p103 = scmp.eq.s32.totalorder %s21, 0
      %p104 = por %p102, %p103
      %p105 = scmp.ne.s32.totalorder %s97, %s99
      %p106 = scmp.eq.s32.totalorder %s26, 1
      %p107 = por %p105, %p106
      %p108 = scmp.ne.s32.totalorder %s99, %s100
      %p109 = scmp.eq.s32.totalorder %s26, 0
      %p110 = por %p108, %p109
      %p111 = scmp.ne.s32.totalorder %s99, %s100
      %p112 = scmp.eq.s32.totalorder %s27, 1
      %p113 = por %p111, %p112
      %p115 = scmp.ne.s32.totalorder %s100, %s114
      %p116 = scmp.eq.s32.totalorder %s27, 0
      %p117 = por %p115, %p116
      %s119 = sadd.s32 %s118, 1
      %p122 = scmp.eq.s32.totalorder %s21, 1
      %p123 = scmp.ne.s32.totalorder %s118, %s120
      %p124 = scmp.eq.s32.totalorder %s21, 0
      %p125 = por %p123, %p124
      %p126 = scmp.ne.s32.totalorder %s118, %s120
      %p127 = scmp.eq.s32.totalorder %s26, 1
      %p128 = por %p126, %p127
      %p129 = scmp.ne.s32.totalorder %s120, %s121
      %p130 = scmp.eq.s32.totalorder %s26, 0
      %p131 = por %p129, %p130
      %p132 = scmp.ne.s32.totalorder %s120, %s121
      %p133 = scmp.eq.s32.totalorder %s27, 1
      %p134 = por %p132, %p133
      %p136 = scmp.ne.s32.totalorder %s121, %s135
      %p137 = scmp.eq.s32.totalorder %s27, 0
      %p138 = por %p136, %p137
      %s140 = sadd.s32 %s139, 1
      %p143 = scmp.eq.s32.totalorder %s21, 1
      %p144 = scmp.ne.s32.totalorder %s139, %s141
      %p145 = scmp.eq.s32.totalorder %s21, 0
      %p146 = por %p144, %p145
      %p147 = scmp.ne.s32.totalorder %s139, %s141
      %p148 = scmp.eq.s32.totalorder %s26, 1
      %p149 = por %p147, %p148
      %p150 = scmp.ne.s32.totalorder %s141, %s142
      %p151 = scmp.eq.s32.totalorder %s26, 0
      %p152 = por %p150, %p151
      %p153 = scmp.ne.s32.totalorder %s141, %s142
      %p154 = scmp.eq.s32.totalorder %s27, 1
      %p155 = por %p153, %p154
      %p157 = scmp.ne.s32.totalorder %s142, %s156
      %p158 = scmp.eq.s32.totalorder %s27, 0
      %p159 = por %p157, %p158
      %s161 = sadd.s32 %s160, 1
      %p164 = scmp.eq.s32.totalorder %s21, 1
      %p165 = scmp.ne.s32.totalorder %s160, %s162
      %p166 = scmp.eq.s32.totalorder %s21, 0
      %p167 = por %p165, %p166
      %p168 = scmp.ne.s32.totalorder %s160, %s162
      %p169 = scmp.eq.s32.totalorder %s26, 1
      %p170 = por %p168, %p169
      %p171 = scmp.ne.s32.totalorder %s162, %s163
      %p172 = scmp.eq.s32.totalorder %s26, 0
      %p173 = por %p171, %p172
      %p174 = scmp.ne.s32.totalorder %s162, %s163
      %p175 = scmp.eq.s32.totalorder %s27, 1
      %p176 = por %p174, %p175
      %p178 = scmp.ne.s32.totalorder %s163, %s177
      %p179 = scmp.eq.s32.totalorder %s27, 0
      %p180 = por %p178, %p179
      %s181 = ssub.s32 %s21, %s28
      %p182 = scmp.eq.s32.totalorder %s181, 0
      %s184 = sadd.s32 %s183, 1
      %s185 = scalar_select %p182, %s183, %s184
      %p188 = pneg %p182
      %p189 = scmp.eq.s32.totalorder %s21, 1
      %p190 = por %p188, %p189
      %p191 = scmp.ne.s32.totalorder %s183, %s186
      %p192 = scmp.eq.s32.totalorder %s21, 0
      %p193 = por %p191, %p192
      %p194 = scmp.ne.s32.totalorder %s183, %s186
      %p195 = scmp.eq.s32.totalorder %s26, 1
      %p196 = por %p194, %p195
      %p197 = scmp.ne.s32.totalorder %s186, %s187
      %p198 = scmp.eq.s32.totalorder %s26, 0
      %p199 = por %p197, %p198
      %p200 = scmp.ne.s32.totalorder %s186, %s187
      %p201 = scmp.eq.s32.totalorder %s27, 1
      %p202 = por %p200, %p201
      %p204 = scmp.ne.s32.totalorder %s187, %s203
      %p205 = scmp.eq.s32.totalorder %s27, 0
      %p206 = por %p204, %p205
      %p207 = scmp.le.s32.totalorder 1, %s21
      %p208 = scmp.lt.s32.totalorder %s21, 3
      %p209 = pnand %p207, %p208
      %p210 = pneg %p209
      // Predicated region
      $region9: #{tpu_custom_call.1} parent=5 // pred_check
        _
      $region10: #{tpu_custom_call.1} parent=5 // pred_check_branch
        %212 = sbr.rel (%p209) target = $region12
      $region11: #{tpu_custom_call.1} parent=5 // pred_region
        %s213 = ssub.s32 %s21, 1
        // Predicated region
        $region13: #{tpu_custom_call.1} parent=11 // pred_check
          %p214 = pneg %p68
        $region14: #{tpu_custom_call.1} parent=11 // pred_check_branch
          %216 = sbr.rel (%p214) target = $region16
        $region15: #{tpu_custom_call.1} parent=11 // pred_region
          %s218 = ssub.s32 2048, 2048
          %219 = vsyncadd [#allocation6], %s218
          %s220 = sshll.u32 [#allocation5], 4
          %s221 = int_to_ptr.vmem [resolvable:$true] %s220
          %226 = dma.hbm_to_vmem [thread:$0]  %s1, 2048, %s221, [#allocation6], 64, 64, 4
        $region16: #{tpu_custom_call.1} parent=11 // pred_fallthru
          _
        // Predicated region
        $region17: #{tpu_custom_call.1} parent=11 // pred_check
          %p227 = pneg %p89
        $region18: #{tpu_custom_call.1} parent=11 // pred_check_branch
          %229 = sbr.rel (%p227) target = $region20
        $region19: #{tpu_custom_call.1} parent=11 // pred_region
          _
        $region20: #{tpu_custom_call.1} parent=11 // pred_fallthru
          _
        // Predicated region
        $region21: #{tpu_custom_call.1} parent=11 // pred_check
          %p230 = pneg %p110
        $region22: #{tpu_custom_call.1} parent=11 // pred_check_branch
          %232 = sbr.rel (%p230) target = $region24
        $region23: #{tpu_custom_call.1} parent=11 // pred_region
          %s234 = ssub.s32 1024, 1024
          %235 = vsyncadd [#allocation6], %s234
          %s236 = sshll.u32 [#allocation7], 4
          %s237 = int_to_ptr.vmem [resolvable:$true] %s236
          %242 = dma.hbm_to_vmem [thread:$0]  %s3, 1024, %s237, [#allocation6], 64, 64, 4
        $region24: #{tpu_custom_call.1} parent=11 // pred_fallthru
          _
        // Predicated region
        $region25: #{tpu_custom_call.1} parent=11 // pred_check
          %p243 = pneg %p131
        $region26: #{tpu_custom_call.1} parent=11 // pred_check_branch
          %245 = sbr.rel (%p243) target = $region28
        $region27: #{tpu_custom_call.1} parent=11 // pred_region
          _
        $region28: #{tpu_custom_call.1} parent=11 // pred_fallthru
          _
        // Predicated region
        $region29: #{tpu_custom_call.1} parent=11 // pred_check
          %p246 = pneg %p152
        $region30: #{tpu_custom_call.1} parent=11 // pred_check_branch
          %248 = sbr.rel (%p246) target = $region32
        $region31: #{tpu_custom_call.1} parent=11 // pred_region
          %s250 = ssub.s32 1024, 1024
          %251 = vsyncadd [#allocation9], %s250
          %s252 = sshll.u32 [#allocation8], 4
          %s253 = int_to_ptr.vmem [resolvable:$true] %s252
          %258 = dma.hbm_to_vmem [thread:$0]  %s5, 1024, %s253, [#allocation9], 64, 64, 4
        $region32: #{tpu_custom_call.1} parent=11 // pred_fallthru
          _
        // Predicated region
        $region33: #{tpu_custom_call.1} parent=11 // pred_check
          %p259 = pneg %p173
        $region34: #{tpu_custom_call.1} parent=11 // pred_check_branch
          %261 = sbr.rel (%p259) target = $region36
        $region35: #{tpu_custom_call.1} parent=11 // pred_region
          _
        $region36: #{tpu_custom_call.1} parent=11 // pred_fallthru
          _
      $region12: #{tpu_custom_call.1} parent=5 // pred_fallthru
        _
      %p262 = scmp.lt.s32.totalorder %s21, 2
      // Predicated region
      $region37: #{tpu_custom_call.1} parent=5 // pred_check
        %p263 = pneg %p262
      $region38: #{tpu_custom_call.1} parent=5 // pred_check_branch
        %265 = sbr.rel (%p263) target = $region40
      $region39: #{tpu_custom_call.1} parent=5 // pred_region
        // Predicated region
        $region41: #{tpu_custom_call.1} parent=39 // pred_check
          %p266 = pneg %p41
        $region42: #{tpu_custom_call.1} parent=39 // pred_check_branch
          %268 = sbr.rel (%p266) target = $region44
        $region43: #{tpu_custom_call.1} parent=39 // pred_region
          %s269 = sand.u32 %s31, 1
          %s270 = scalar_lea.sflag [#allocation3], %s269
          %s271 = sand.u32 %s31, 1
          %s272 = smul.addr %s271, 256
          %s273 = scalar_lea.vmem [#allocation2], %s272
          %s274 = smul.u32 16, %s21
          %s276 = ssub.s32 4096, 4096
          %277 = vsyncadd %s270, %s276
          %s278 = smul.addr %s274, 2
          %s279 = smul.addr %s278, 128
          %s280 = scalar_lea.hbm %s0, %s279
          %s281 = sshll.u32 %s273, 4
          %s282 = int_to_ptr.vmem [resolvable:$true] %s281
          %287 = dma.hbm_to_vmem [thread:$0]  %s280, 4096, %s282, %s270, 256, 256, 16
        $region44: #{tpu_custom_call.1} parent=39 // pred_fallthru
          _
      $region40: #{tpu_custom_call.1} parent=5 // pred_fallthru
        _
      %p288 = scmp.le.s32.totalorder 1, %s21
      %p289 = scmp.lt.s32.totalorder %s21, 3
      %p290 = pnand %p288, %p289
      %p291 = pneg %p290
      // Predicated region
      $region45: #{tpu_custom_call.1} parent=5 // pred_check
        _
      $region46: #{tpu_custom_call.1} parent=5 // pred_check_branch
        %293 = sbr.rel (%p290) target = $region48
      $region47: #{tpu_custom_call.1} parent=5 // pred_region
        %s294 = ssub.s32 %s21, 1
        %s295 = sand.u32 %s34, 1
        %s296 = scalar_lea.sflag [#allocation3], %s295
        %s297 = sand.u32 %s34, 1
        %s298 = smul.addr %s297, 256
        %s299 = scalar_lea.vmem [#allocation2], %s298
        // Predicated region
        $region49: #{tpu_custom_call.1} parent=47 // pred_check
          %p300 = pneg %p47
        $region50: #{tpu_custom_call.1} parent=47 // pred_check_branch
          %302 = sbr.rel (%p300) target = $region52
        $region51: #{tpu_custom_call.1} parent=47 // pred_region
          %303 = dma.done %s296, 4096
        $region52: #{tpu_custom_call.1} parent=47 // pred_fallthru
          _
        // Predicated region
        $region53: #{tpu_custom_call.1} parent=47 // pred_check
          %p304 = pneg %p68
        $region54: #{tpu_custom_call.1} parent=47 // pred_check_branch
          %306 = sbr.rel (%p304) target = $region56
        $region55: #{tpu_custom_call.1} parent=47 // pred_region
          %307 = dma.done [#allocation6], 2048
        $region56: #{tpu_custom_call.1} parent=47 // pred_fallthru
          _
        // Predicated region
        $region57: #{tpu_custom_call.1} parent=47 // pred_check
          %p308 = pneg %p110
        $region58: #{tpu_custom_call.1} parent=47 // pred_check_branch
          %310 = sbr.rel (%p308) target = $region60
        $region59: #{tpu_custom_call.1} parent=47 // pred_region
          %311 = dma.done [#allocation6], 1024
        $region60: #{tpu_custom_call.1} parent=47 // pred_fallthru
          _
        // Predicated region
        $region61: #{tpu_custom_call.1} parent=47 // pred_check
          %p312 = pneg %p152
        $region62: #{tpu_custom_call.1} parent=47 // pred_check_branch
          %314 = sbr.rel (%p312) target = $region64
        $region63: #{tpu_custom_call.1} parent=47 // pred_region
          %315 = dma.done [#allocation9], 1024
        $region64: #{tpu_custom_call.1} parent=47 // pred_fallthru
          _
        %s316 = sand.u32 %s34, 1
        %s317 = scalar_lea.sflag [#allocation3], %s316
        %s318 = sand.u32 %s34, 1
        %s319 = smul.addr %s318, 256
        %s320 = scalar_lea.vmem [#allocation2], %s319
        %p321 = pneg %p47
        %p322 = pneg %p44
        %p323 = pneg %p68
        %p324 = pneg %p65
        %p325 = pneg %p89
        %p326 = pneg %p86
        %p327 = pneg %p110
        %p328 = pneg %p107
        %p329 = pneg %p131
        %p330 = pneg %p128
        %p331 = pneg %p152
        %p332 = pneg %p149
        %p333 = pneg %p173
        %p334 = pneg %p170
        %p335 = pneg %p199
        %p336 = pneg %p196
        %s337 = sand.u32 %s186, 1
        %s338 = scalar_lea.sflag [#allocation4], %s337
        %s339 = sand.u32 %s186, 1
        %s340 = smul.addr %s339, 128
        %s341 = scalar_lea.vmem [#allocation10], %s340
        %s342 = smul.u32 16, %s26
        %s343 = smul.u32 16, %s26
        %v345 = vld [vmem:[%s299] sm:$0xff]
        %v346 = vld [vmem:[%s299 + $0x8] sm:$0xff]
        %v347 = vld [vmem:[%s299 + $0x10] sm:$0xff]
        %v348 = vld [vmem:[%s299 + $0x18] sm:$0xff]
        %v349 = vld [vmem:[%s299 + $0x20] sm:$0xff]
        %v350 = vld [vmem:[%s299 + $0x28] sm:$0xff]
        %v351 = vld [vmem:[%s299 + $0x30] sm:$0xff]
        %v352 = vld [vmem:[%s299 + $0x38] sm:$0xff]
        %v353 = vld [vmem:[%s299 + $0x40] sm:$0xff]
        %v354 = vld [vmem:[%s299 + $0x48] sm:$0xff]
        %v355 = vld [vmem:[%s299 + $0x50] sm:$0xff]
        %v356 = vld [vmem:[%s299 + $0x58] sm:$0xff]
        %v357 = vld [vmem:[%s299 + $0x60] sm:$0xff]
        %v358 = vld [vmem:[%s299 + $0x68] sm:$0xff]
        %v359 = vld [vmem:[%s299 + $0x70] sm:$0xff]
        %v360 = vld [vmem:[%s299 + $0x78] sm:$0xff]
        %v361 = vld [vmem:[%s299 + $0x80] sm:$0xff]
        %v362 = vld [vmem:[%s299 + $0x88] sm:$0xff]
        %v363 = vld [vmem:[%s299 + $0x90] sm:$0xff]
        %v364 = vld [vmem:[%s299 + $0x98] sm:$0xff]
        %v365 = vld [vmem:[%s299 + $0xa0] sm:$0xff]
        %v366 = vld [vmem:[%s299 + $0xa8] sm:$0xff]
        %v367 = vld [vmem:[%s299 + $0xb0] sm:$0xff]
        %v368 = vld [vmem:[%s299 + $0xb8] sm:$0xff]
        %v369 = vld [vmem:[%s299 + $0xc0] sm:$0xff]
        %v370 = vld [vmem:[%s299 + $0xc8] sm:$0xff]
        %v371 = vld [vmem:[%s299 + $0xd0] sm:$0xff]
        %v372 = vld [vmem:[%s299 + $0xd8] sm:$0xff]
        %v373 = vld [vmem:[%s299 + $0xe0] sm:$0xff]
        %v374 = vld [vmem:[%s299 + $0xe8] sm:$0xff]
        %v375 = vld [vmem:[%s299 + $0xf0] sm:$0xff]
        %v376 = vld [vmem:[%s299 + $0xf8] sm:$0xff]
        %v377 = vpack.c.bf16 %v347, %v345
        %v378 = vpack.c.bf16 %v348, %v346
        %v379 = vpack.c.bf16 %v351, %v349
        %v380 = vpack.c.bf16 %v352, %v350
        %v381 = vpack.c.bf16 %v355, %v353
        %v382 = vpack.c.bf16 %v356, %v354
        %v383 = vpack.c.bf16 %v359, %v357
        %v384 = vpack.c.bf16 %v360, %v358
        %v385 = vpack.c.bf16 %v363, %v361
        %v386 = vpack.c.bf16 %v364, %v362
        %v387 = vpack.c.bf16 %v367, %v365
        %v388 = vpack.c.bf16 %v368, %v366
        %v389 = vpack.c.bf16 %v371, %v369
        %v390 = vpack.c.bf16 %v372, %v370
        %v391 = vpack.c.bf16 %v375, %v373
        %v392 = vpack.c.bf16 %v376, %v374
        %v393 = vld [vmem:[#allocation5] sm:$0xf]
        %v394 = vld [vmem:[#allocation5 + $0x4] sm:$0xf]
        %v395 = vld [vmem:[#allocation5 + $0x8] sm:$0xf]
        %v396 = vld [vmem:[#allocation5 + $0xc] sm:$0xf]
        %v397 = vld [vmem:[#allocation5 + $0x10] sm:$0xf]
        %v398 = vld [vmem:[#allocation5 + $0x14] sm:$0xf]
        %v399 = vld [vmem:[#allocation5 + $0x18] sm:$0xf]
        %v400 = vld [vmem:[#allocation5 + $0x1c] sm:$0xf]
        %v401 = vld [vmem:[#allocation5 + $0x20] sm:$0xf]
        %v402 = vld [vmem:[#allocation5 + $0x24] sm:$0xf]
        %v403 = vld [vmem:[#allocation5 + $0x28] sm:$0xf]
        %v404 = vld [vmem:[#allocation5 + $0x2c] sm:$0xf]
        %v405 = vld [vmem:[#allocation5 + $0x30] sm:$0xf]
        %v406 = vld [vmem:[#allocation5 + $0x34] sm:$0xf]
        %v407 = vld [vmem:[#allocation5 + $0x38] sm:$0xf]
        %v408 = vld [vmem:[#allocation5 + $0x3c] sm:$0xf]
        %v409 = vld [vmem:[#allocation5 + $0x40] sm:$0xf]
        %v410 = vld [vmem:[#allocation5 + $0x44] sm:$0xf]
        %v411 = vld [vmem:[#allocation5 + $0x48] sm:$0xf]
        %v412 = vld [vmem:[#allocation5 + $0x4c] sm:$0xf]
        %v413 = vld [vmem:[#allocation5 + $0x50] sm:$0xf]
        %v414 = vld [vmem:[#allocation5 + $0x54] sm:$0xf]
        %v415 = vld [vmem:[#allocation5 + $0x58] sm:$0xf]
        %v416 = vld [vmem:[#allocation5 + $0x5c] sm:$0xf]
        %v417 = vld [vmem:[#allocation5 + $0x60] sm:$0xf]
        %v418 = vld [vmem:[#allocation5 + $0x64] sm:$0xf]
        %v419 = vld [vmem:[#allocation5 + $0x68] sm:$0xf]
        %v420 = vld [vmem:[#allocation5 + $0x6c] sm:$0xf]
        %v421 = vld [vmem:[#allocation5 + $0x70] sm:$0xf]
        %v422 = vld [vmem:[#allocation5 + $0x74] sm:$0xf]
        %v423 = vld [vmem:[#allocation5 + $0x78] sm:$0xf]
        %v424 = vld [vmem:[#allocation5 + $0x7c] sm:$0xf]
        %v425 = vld [vmem:[%s2] sm:$0x1]
        %v427 = vlaneseq
        %v428 = vshrl.u32 %v427, 7
        %v429 = vsub.s32 0, %v428
        %v430 = vrot.slane %v425, %v429
        %v464 = vunpack.c.l.b16 %v393
        %v465 = vunpack.c.l.b16 %v394
        %v466 = vunpack.c.l.b16 %v395
        %v467 = vunpack.c.l.b16 %v396
        %v468 = vunpack.c.l.b16 %v397
        %v469 = vunpack.c.l.b16 %v398
        %v470 = vunpack.c.l.b16 %v399
        %v471 = vunpack.c.l.b16 %v400
        %v472 = vunpack.c.l.b16 %v401
        %v473 = vunpack.c.l.b16 %v402
        %v474 = vunpack.c.l.b16 %v403
        %v475 = vunpack.c.l.b16 %v404
        %v476 = vunpack.c.l.b16 %v405
        %v477 = vunpack.c.l.b16 %v406
        %v478 = vunpack.c.l.b16 %v407
        %v479 = vunpack.c.l.b16 %v408
        %v480 = vunpack.c.l.b16 %v409
        %v481 = vunpack.c.l.b16 %v410
        %v482 = vunpack.c.l.b16 %v411
        %v483 = vunpack.c.l.b16 %v412
        %v484 = vunpack.c.l.b16 %v413
        %v485 = vunpack.c.l.b16 %v414
        %v486 = vunpack.c.l.b16 %v415
        %v487 = vunpack.c.l.b16 %v416
        %v488 = vunpack.c.l.b16 %v417
        %v489 = vunpack.c.l.b16 %v418
        %v490 = vunpack.c.l.b16 %v419
        %v491 = vunpack.c.l.b16 %v420
        %v492 = vunpack.c.l.b16 %v421
        %v493 = vunpack.c.l.b16 %v422
        %v494 = vunpack.c.l.b16 %v423
        %v495 = vunpack.c.l.b16 %v424
        %v496 = vpack.c.b16 %v465, %v464
        %v497 = vpack.c.b16 %v467, %v466
        %v498 = vpack.c.b16 %v469, %v468
        %v499 = vpack.c.b16 %v471, %v470
        %v500 = vpack.c.b16 %v473, %v472
        %v501 = vpack.c.b16 %v475, %v474
        %v502 = vpack.c.b16 %v477, %v476
        %v503 = vpack.c.b16 %v479, %v478
        %v504 = vpack.c.b16 %v481, %v480
        %v505 = vpack.c.b16 %v483, %v482
        %v506 = vpack.c.b16 %v485, %v484
        %v507 = vpack.c.b16 %v487, %v486
        %v508 = vpack.c.b16 %v489, %v488
        %v509 = vpack.c.b16 %v491, %v490
        %v510 = vpack.c.b16 %v493, %v492
        %v511 = vpack.c.b16 %v495, %v494
        %528 = vmatprep.subr.bf16.mxu0 0
        %529 = vmatpush1.bf16.msra.mxu0 %v496
        %530 = vmatprep.subr.bf16.mxu0 0
        %531 = vmatpush1.bf16.msra.mxu0 %v497
        %532 = vmatprep.subr.bf16.mxu0 0
        %533 = vmatpush1.bf16.msra.mxu0 %v498
        %534 = vmatprep.subr.bf16.mxu0 0
        %535 = vmatpush1.bf16.msra.mxu0 %v499
        %536 = vmatprep.subr.bf16.mxu0 0
        %537 = vmatpush1.bf16.msra.mxu0 %v500
        %538 = vmatprep.subr.bf16.mxu0 0
        %539 = vmatpush1.bf16.msra.mxu0 %v501
        %540 = vmatprep.subr.bf16.mxu0 0
        %541 = vmatpush1.bf16.msra.mxu0 %v502
        %542 = vmatprep.subr.bf16.mxu0 0
        %543 = vmatpush1.bf16.msra.mxu0 %v503
        %544 = vmatprep.subr.bf16.mxu0 0
        %545 = vmatpush1.bf16.msra.mxu0 %v504
        %546 = vmatprep.subr.bf16.mxu0 0
        %547 = vmatpush1.bf16.msra.mxu0 %v505
        %548 = vmatprep.subr.bf16.mxu0 0
        %549 = vmatpush1.bf16.msra.mxu0 %v506
        %550 = vmatprep.subr.bf16.mxu0 0
        %551 = vmatpush1.bf16.msra.mxu0 %v507
        %552 = vmatprep.subr.bf16.mxu0 0
        %553 = vmatpush1.bf16.msra.mxu0 %v508
        %554 = vmatprep.subr.bf16.mxu0 0
        %555 = vmatpush1.bf16.msra.mxu0 %v509
        %556 = vmatprep.subr.bf16.mxu0 0
        %557 = vmatpush1.bf16.msra.mxu0 %v510
        %558 = vmatprep.subr.bf16.mxu0 0
        %559 = vmatpush1.bf16.msra.mxu0 %v511
        %560 = vmatprep.mubr.bf16.mxu0 %v378
        %561 = vmatmul.mubr.bf16.gmra.mrb[0].mxu0 %v377
        %v562 = vpop.f32.mrb[0].mxu0
        %v563 = vadd.f32 %v430, %v562
        %v564 = vpop.f32.mrb[0].mxu0
        %v565 = vpop.f32.mrb[0].mxu0
        %v566 = vadd.f32 %v430, %v565
        %v567 = vpop.f32.mrb[0].mxu0
        %568 = vmatprep.mubr.bf16.mxu0 %v380
        %569 = vmatmul.mubr.bf16.gmra.mrb[0].mxu0 %v379
        %v570 = vpop.f32.mrb[0].mxu0
        %v571 = vadd.f32 %v430, %v570
        %v572 = vpop.f32.mrb[0].mxu0
        %v573 = vpop.f32.mrb[0].mxu0
        %v574 = vadd.f32 %v430, %v573
        %v575 = vpop.f32.mrb[0].mxu0
        %576 = vmatprep.mubr.bf16.mxu0 %v382
        %577 = vmatmul.mubr.bf16.gmra.mrb[0].mxu0 %v381
        %v578 = vpop.f32.mrb[0].mxu0
        %v579 = vadd.f32 %v430, %v578
        %v580 = vpop.f32.mrb[0].mxu0
        %v581 = vpop.f32.mrb[0].mxu0
        %v582 = vadd.f32 %v430, %v581
        %v583 = vpop.f32.mrb[0].mxu0
        %584 = vmatprep.mubr.bf16.mxu0 %v384
        %585 = vmatmul.mubr.bf16.gmra.mrb[0].mxu0 %v383
        %v586 = vpop.f32.mrb[0].mxu0
        %v587 = vadd.f32 %v430, %v586
        %v588 = vpop.f32.mrb[0].mxu0
        %v589 = vpop.f32.mrb[0].mxu0
        %v590 = vadd.f32 %v430, %v589
        %v591 = vpop.f32.mrb[0].mxu0
        %592 = vmatprep.mubr.bf16.mxu0 %v386
        %593 = vmatmul.mubr.bf16.gmra.mrb[0].mxu0 %v385
        %v594 = vpop.f32.mrb[0].mxu0
        %v595 = vadd.f32 %v430, %v594
        %v596 = vpop.f32.mrb[0].mxu0
        %v597 = vpop.f32.mrb[0].mxu0
        %v598 = vadd.f32 %v430, %v597
        %v599 = vpop.f32.mrb[0].mxu0
        %600 = vmatprep.mubr.bf16.mxu0 %v388
        %601 = vmatmul.mubr.bf16.gmra.mrb[0].mxu0 %v387
        %v602 = vpop.f32.mrb[0].mxu0
        %v603 = vadd.f32 %v430, %v602
        %v604 = vpop.f32.mrb[0].mxu0
        %v605 = vpop.f32.mrb[0].mxu0
        %v606 = vadd.f32 %v430, %v605
        %v607 = vpop.f32.mrb[0].mxu0
        %608 = vmatprep.mubr.bf16.mxu0 %v390
        %609 = vmatmul.mubr.bf16.gmra.mrb[0].mxu0 %v389
        %v610 = vpop.f32.mrb[0].mxu0
        %v611 = vadd.f32 %v430, %v610
        %v612 = vpop.f32.mrb[0].mxu0
        %v613 = vpop.f32.mrb[0].mxu0
        %v614 = vadd.f32 %v430, %v613
        %v615 = vpop.f32.mrb[0].mxu0
        %616 = vmatprep.mubr.bf16.mxu0 %v392
        %617 = vmatmul.mubr.bf16.gmra.mrb[0].mxu0 %v391
        %v618 = vpop.f32.mrb[0].mxu0
        %v619 = vadd.f32 %v430, %v618
        %v620 = vpop.f32.mrb[0].mxu0
        %v621 = vpop.f32.mrb[0].mxu0
        %v622 = vadd.f32 %v430, %v621
        %v623 = vpop.f32.mrb[0].mxu0
        %624 = vdwg.mxu0
        %v625 = vmax.f32 %v563, 0.0
        %v626 = vmax.f32 %v566, 0.0
        %v627 = vmax.f32 %v571, 0.0
        %v628 = vmax.f32 %v574, 0.0
        %v629 = vmax.f32 %v579, 0.0
        %v630 = vmax.f32 %v582, 0.0
        %v631 = vmax.f32 %v587, 0.0
        %v632 = vmax.f32 %v590, 0.0
        %v633 = vmax.f32 %v595, 0.0
        %v634 = vmax.f32 %v598, 0.0
        %v635 = vmax.f32 %v603, 0.0
        %v636 = vmax.f32 %v606, 0.0
        %v637 = vmax.f32 %v611, 0.0
        %v638 = vmax.f32 %v614, 0.0
        %v639 = vmax.f32 %v619, 0.0
        %v640 = vmax.f32 %v622, 0.0
        %v641 = vpack.c.bf16 %v626, %v625
        %v642 = vpack.c.bf16 %v628, %v627
        %v643 = vpack.c.bf16 %v630, %v629
        %v644 = vpack.c.bf16 %v632, %v631
        %v645 = vpack.c.bf16 %v634, %v633
        %v646 = vpack.c.bf16 %v636, %v635
        %v647 = vpack.c.bf16 %v638, %v637
        %v648 = vpack.c.bf16 %v640, %v639
        %v649 = vld [vmem:[#allocation7] sm:$0xf]
        %v650 = vld [vmem:[#allocation7 + $0x4] sm:$0xf]
        %v651 = vld [vmem:[#allocation7 + $0x8] sm:$0xf]
        %v652 = vld [vmem:[#allocation7 + $0xc] sm:$0xf]
        %v653 = vld [vmem:[#allocation7 + $0x10] sm:$0xf]
        %v654 = vld [vmem:[#allocation7 + $0x14] sm:$0xf]
        %v655 = vld [vmem:[#allocation7 + $0x18] sm:$0xf]
        %v656 = vld [vmem:[#allocation7 + $0x1c] sm:$0xf]
        %v657 = vld [vmem:[#allocation7 + $0x20] sm:$0xf]
        %v658 = vld [vmem:[#allocation7 + $0x24] sm:$0xf]
        %v659 = vld [vmem:[#allocation7 + $0x28] sm:$0xf]
        %v660 = vld [vmem:[#allocation7 + $0x2c] sm:$0xf]
        %v661 = vld [vmem:[#allocation7 + $0x30] sm:$0xf]
        %v662 = vld [vmem:[#allocation7 + $0x34] sm:$0xf]
        %v663 = vld [vmem:[#allocation7 + $0x38] sm:$0xf]
        %v664 = vld [vmem:[#allocation7 + $0x3c] sm:$0xf]
        %v665 = vld [vmem:[%s4] sm:$0x1]
        %v667 = vlaneseq
        %v668 = vshrl.u32 %v667, 7
        %v669 = vsub.s32 0, %v668
        %v670 = vrot.slane %v665, %v669
        %v688 = vunpack.c.l.b16 %v649
        %v689 = vunpack.c.l.b16 %v650
        %v690 = vunpack.c.l.b16 %v651
        %v691 = vunpack.c.l.b16 %v652
        %v692 = vunpack.c.l.b16 %v653
        %v693 = vunpack.c.l.b16 %v654
        %v694 = vunpack.c.l.b16 %v655
        %v695 = vunpack.c.l.b16 %v656
        %v696 = vunpack.c.l.b16 %v657
        %v697 = vunpack.c.l.b16 %v658
        %v698 = vunpack.c.l.b16 %v659
        %v699 = vunpack.c.l.b16 %v660
        %v700 = vunpack.c.l.b16 %v661
        %v701 = vunpack.c.l.b16 %v662
        %v702 = vunpack.c.l.b16 %v663
        %v703 = vunpack.c.l.b16 %v664
        %v704 = vpack.c.b16 %v689, %v688
        %v705 = vpack.c.b16 %v691, %v690
        %v706 = vpack.c.b16 %v693, %v692
        %v707 = vpack.c.b16 %v695, %v694
        %v708 = vpack.c.b16 %v697, %v696
        %v709 = vpack.c.b16 %v699, %v698
        %v710 = vpack.c.b16 %v701, %v700
        %v711 = vpack.c.b16 %v703, %v702
        %720 = vmatprep.subr.bf16.mxu0 0
        %721 = vmatpush1.bf16.msra.mxu0 %v704
        %722 = vmatprep.subr.bf16.mxu0 0
        %723 = vmatpush1.bf16.msra.mxu0 %v705
        %724 = vmatprep.subr.bf16.mxu0 0
        %725 = vmatpush1.bf16.msra.mxu0 %v706
        %726 = vmatprep.subr.bf16.mxu0 0
        %727 = vmatpush1.bf16.msra.mxu0 %v707
        %728 = vmatprep.subr.bf16.mxu0 0
        %729 = vmatpush1.bf16.msra.mxu0 %v708
        %730 = vmatprep.subr.bf16.mxu0 0
        %731 = vmatpush1.bf16.msra.mxu0 %v709
        %732 = vmatprep.subr.bf16.mxu0 0
        %733 = vmatpush1.bf16.msra.mxu0 %v710
        %734 = vmatprep.subr.bf16.mxu0 0
        %735 = vmatpush1.bf16.msra.mxu0 %v711
        %736 = vmatprep.subr.bf16.mxu0 0
        %737 = vmatpush1.bf16.msra.mxu0 0
        %738 = vmatprep.subr.bf16.mxu0 0
        %739 = vmatpush1.bf16.msra.mxu0 0
        %740 = vmatprep.subr.bf16.mxu0 0
        %741 = vmatpush1.bf16.msra.mxu0 0
        %742 = vmatprep.subr.bf16.mxu0 0
        %743 = vmatpush1.bf16.msra.mxu0 0
        %744 = vmatprep.subr.bf16.mxu0 0
        %745 = vmatpush1.bf16.msra.mxu0 0
        %746 = vmatprep.subr.bf16.mxu0 0
        %747 = vmatpush1.bf16.msra.mxu0 0
        %748 = vmatprep.subr.bf16.mxu0 0
        %749 = vmatpush1.bf16.msra.mxu0 0
        %750 = vmatprep.subr.bf16.mxu0 0
        %751 = vmatpush1.bf16.msra.mxu0 0
        %752 = vmatprep.mubr.bf16.mxu0 0
        %753 = vmatmul.mubr.bf16.gmra.mrb[0].mxu0 %v641
        %v754 = vpop.f32.mrb[0].mxu0
        %v755 = vadd.f32 %v670, %v754
        %v756 = vpop.f32.mrb[0].mxu0
        %v757 = vpop.f32.mrb[0].mxu0
        %v758 = vadd.f32 %v670, %v757
        %v759 = vpop.f32.mrb[0].mxu0
        %760 = vmatprep.mubr.bf16.mxu0 0
        %761 = vmatmul.mubr.bf16.gmra.mrb[0].mxu0 %v642
        %v762 = vpop.f32.mrb[0].mxu0
        %v763 = vadd.f32 %v670, %v762
        %v764 = vpop.f32.mrb[0].mxu0
        %v765 = vpop.f32.mrb[0].mxu0
        %v766 = vadd.f32 %v670, %v765
        %v767 = vpop.f32.mrb[0].mxu0
        %768 = vmatprep.mubr.bf16.mxu0 0
        %769 = vmatmul.mubr.bf16.gmra.mrb[0].mxu0 %v643
        %v770 = vpop.f32.mrb[0].mxu0
        %v771 = vadd.f32 %v670, %v770
        %v772 = vpop.f32.mrb[0].mxu0
        %v773 = vpop.f32.mrb[0].mxu0
        %v774 = vadd.f32 %v670, %v773
        %v775 = vpop.f32.mrb[0].mxu0
        %776 = vmatprep.mubr.bf16.mxu0 0
        %777 = vmatmul.mubr.bf16.gmra.mrb[0].mxu0 %v644
        %v778 = vpop.f32.mrb[0].mxu0
        %v779 = vadd.f32 %v670, %v778
        %v780 = vpop.f32.mrb[0].mxu0
        %v781 = vpop.f32.mrb[0].mxu0
        %v782 = vadd.f32 %v670, %v781
        %v783 = vpop.f32.mrb[0].mxu0
        %784 = vmatprep.mubr.bf16.mxu0 0
        %785 = vmatmul.mubr.bf16.gmra.mrb[0].mxu0 %v645
        %v786 = vpop.f32.mrb[0].mxu0
        %v787 = vadd.f32 %v670, %v786
        %v788 = vpop.f32.mrb[0].mxu0
        %v789 = vpop.f32.mrb[0].mxu0
        %v790 = vadd.f32 %v670, %v789
        %v791 = vpop.f32.mrb[0].mxu0
        %792 = vmatprep.mubr.bf16.mxu0 0
        %793 = vmatmul.mubr.bf16.gmra.mrb[0].mxu0 %v646
        %v794 = vpop.f32.mrb[0].mxu0
        %v795 = vadd.f32 %v670, %v794
        %v796 = vpop.f32.mrb[0].mxu0
        %v797 = vpop.f32.mrb[0].mxu0
        %v798 = vadd.f32 %v670, %v797
        %v799 = vpop.f32.mrb[0].mxu0
        %800 = vmatprep.mubr.bf16.mxu0 0
        %801 = vmatmul.mubr.bf16.gmra.mrb[0].mxu0 %v647
        %v802 = vpop.f32.mrb[0].mxu0
        %v803 = vadd.f32 %v670, %v802
        %v804 = vpop.f32.mrb[0].mxu0
        %v805 = vpop.f32.mrb[0].mxu0
        %v806 = vadd.f32 %v670, %v805
        %v807 = vpop.f32.mrb[0].mxu0
        %808 = vmatprep.mubr.bf16.mxu0 0
        %809 = vmatmul.mubr.bf16.gmra.mrb[0].mxu0 %v648
        %v810 = vpop.f32.mrb[0].mxu0
        %v811 = vadd.f32 %v670, %v810
        %v812 = vpop.f32.mrb[0].mxu0
        %v813 = vpop.f32.mrb[0].mxu0
        %v814 = vadd.f32 %v670, %v813
        %v815 = vpop.f32.mrb[0].mxu0
        %816 = vdwg.mxu0
        %v817 = vmax.f32 %v755, 0.0
        %v818 = vmax.f32 %v758, 0.0
        %v819 = vmax.f32 %v763, 0.0
        %v820 = vmax.f32 %v766, 0.0
        %v821 = vmax.f32 %v771, 0.0
        %v822 = vmax.f32 %v774, 0.0
        %v823 = vmax.f32 %v779, 0.0
        %v824 = vmax.f32 %v782, 0.0
        %v825 = vmax.f32 %v787, 0.0
        %v826 = vmax.f32 %v790, 0.0
        %v827 = vmax.f32 %v795, 0.0
        %v828 = vmax.f32 %v798, 0.0
        %v829 = vmax.f32 %v803, 0.0
        %v830 = vmax.f32 %v806, 0.0
        %v831 = vmax.f32 %v811, 0.0
        %v832 = vmax.f32 %v814, 0.0
        %v833 = vpack.c.bf16 %v818, %v817
        %v834 = vpack.c.bf16 %v820, %v819
        %v835 = vpack.c.bf16 %v822, %v821
        %v836 = vpack.c.bf16 %v824, %v823
        %v837 = vpack.c.bf16 %v826, %v825
        %v838 = vpack.c.bf16 %v828, %v827
        %v839 = vpack.c.bf16 %v830, %v829
        %v840 = vpack.c.bf16 %v832, %v831
        %v841 = vld [vmem:[#allocation8] sm:$0xf]
        %v842 = vld [vmem:[#allocation8 + $0x4] sm:$0xf]
        %v843 = vld [vmem:[#allocation8 + $0x8] sm:$0xf]
        %v844 = vld [vmem:[#allocation8 + $0xc] sm:$0xf]
        %v845 = vld [vmem:[#allocation8 + $0x10] sm:$0xf]
        %v846 = vld [vmem:[#allocation8 + $0x14] sm:$0xf]
        %v847 = vld [vmem:[#allocation8 + $0x18] sm:$0xf]
        %v848 = vld [vmem:[#allocation8 + $0x1c] sm:$0xf]
        %v849 = vld [vmem:[#allocation8 + $0x20] sm:$0xf]
        %v850 = vld [vmem:[#allocation8 + $0x24] sm:$0xf]
        %v851 = vld [vmem:[#allocation8 + $0x28] sm:$0xf]
        %v852 = vld [vmem:[#allocation8 + $0x2c] sm:$0xf]
        %v853 = vld [vmem:[#allocation8 + $0x30] sm:$0xf]
        %v854 = vld [vmem:[#allocation8 + $0x34] sm:$0xf]
        %v855 = vld [vmem:[#allocation8 + $0x38] sm:$0xf]
        %v856 = vld [vmem:[#allocation8 + $0x3c] sm:$0xf]
        %v857 = vld [vmem:[%s6] sm:$0x1]
        %v859 = vlaneseq
        %v860 = vshrl.u32 %v859, 7
        %v861 = vsub.s32 0, %v860
        %v862 = vrot.slane %v857, %v861
        %v880 = vunpack.c.l.b16 %v841
        %v881 = vunpack.c.l.b16 %v842
        %v882 = vunpack.c.l.b16 %v843
        %v883 = vunpack.c.l.b16 %v844
        %v884 = vunpack.c.l.b16 %v845
        %v885 = vunpack.c.l.b16 %v846
        %v886 = vunpack.c.l.b16 %v847
        %v887 = vunpack.c.l.b16 %v848
        %v888 = vunpack.c.l.b16 %v849
        %v889 = vunpack.c.l.b16 %v850
        %v890 = vunpack.c.l.b16 %v851
        %v891 = vunpack.c.l.b16 %v852
        %v892 = vunpack.c.l.b16 %v853
        %v893 = vunpack.c.l.b16 %v854
        %v894 = vunpack.c.l.b16 %v855
        %v895 = vunpack.c.l.b16 %v856
        %v896 = vpack.c.b16 %v881, %v880
        %v897 = vpack.c.b16 %v883, %v882
        %v898 = vpack.c.b16 %v885, %v884
        %v899 = vpack.c.b16 %v887, %v886
        %v900 = vpack.c.b16 %v889, %v888
        %v901 = vpack.c.b16 %v891, %v890
        %v902 = vpack.c.b16 %v893, %v892
        %v903 = vpack.c.b16 %v895, %v894
        %912 = vmatprep.subr.bf16.mxu0 0
        %913 = vmatpush1.bf16.msra.mxu0 %v896
        %914 = vmatprep.subr.bf16.mxu0 0
        %915 = vmatpush1.bf16.msra.mxu0 %v897
        %916 = vmatprep.subr.bf16.mxu0 0
        %917 = vmatpush1.bf16.msra.mxu0 %v898
        %918 = vmatprep.subr.bf16.mxu0 0
        %919 = vmatpush1.bf16.msra.mxu0 %v899
        %920 = vmatprep.subr.bf16.mxu0 0
        %921 = vmatpush1.bf16.msra.mxu0 %v900
        %922 = vmatprep.subr.bf16.mxu0 0
        %923 = vmatpush1.bf16.msra.mxu0 %v901
        %924 = vmatprep.subr.bf16.mxu0 0
        %925 = vmatpush1.bf16.msra.mxu0 %v902
        %926 = vmatprep.subr.bf16.mxu0 0
        %927 = vmatpush1.bf16.msra.mxu0 %v903
        %928 = vmatprep.subr.bf16.mxu0 0
        %929 = vmatpush1.bf16.msra.mxu0 0
        %930 = vmatprep.subr.bf16.mxu0 0
        %931 = vmatpush1.bf16.msra.mxu0 0
        %932 = vmatprep.subr.bf16.mxu0 0
        %933 = vmatpush1.bf16.msra.mxu0 0
        %934 = vmatprep.subr.bf16.mxu0 0
        %935 = vmatpush1.bf16.msra.mxu0 0
        %936 = vmatprep.subr.bf16.mxu0 0
        %937 = vmatpush1.bf16.msra.mxu0 0
        %938 = vmatprep.subr.bf16.mxu0 0
        %939 = vmatpush1.bf16.msra.mxu0 0
        %940 = vmatprep.subr.bf16.mxu0 0
        %941 = vmatpush1.bf16.msra.mxu0 0
        %942 = vmatprep.subr.bf16.mxu0 0
        %943 = vmatpush1.bf16.msra.mxu0 0
        %944 = vmatprep.mubr.bf16.mxu0 0
        %945 = vmatmul.mubr.bf16.gmra.mrb[0].mxu0 %v833
        %v946 = vpop.f32.mrb[0].mxu0
        %v947 = vadd.f32 %v862, %v946
        %v948 = vpop.f32.mrb[0].mxu0
        %v949 = vpop.f32.mrb[0].mxu0
        %v950 = vadd.f32 %v862, %v949
        %v951 = vpop.f32.mrb[0].mxu0
        %952 = vmatprep.mubr.bf16.mxu0 0
        %953 = vmatmul.mubr.bf16.gmra.mrb[0].mxu0 %v834
        %v954 = vpop.f32.mrb[0].mxu0
        %v955 = vadd.f32 %v862, %v954
        %v956 = vpop.f32.mrb[0].mxu0
        %v957 = vpop.f32.mrb[0].mxu0
        %v958 = vadd.f32 %v862, %v957
        %v959 = vpop.f32.mrb[0].mxu0
        %960 = vmatprep.mubr.bf16.mxu0 0
        %961 = vmatmul.mubr.bf16.gmra.mrb[0].mxu0 %v835
        %v962 = vpop.f32.mrb[0].mxu0
        %v963 = vadd.f32 %v862, %v962
        %v964 = vpop.f32.mrb[0].mxu0
        %v965 = vpop.f32.mrb[0].mxu0
        %v966 = vadd.f32 %v862, %v965
        %v967 = vpop.f32.mrb[0].mxu0
        %968 = vmatprep.mubr.bf16.mxu0 0
        %969 = vmatmul.mubr.bf16.gmra.mrb[0].mxu0 %v836
        %v970 = vpop.f32.mrb[0].mxu0
        %v971 = vadd.f32 %v862, %v970
        %v972 = vpop.f32.mrb[0].mxu0
        %v973 = vpop.f32.mrb[0].mxu0
        %v974 = vadd.f32 %v862, %v973
        %v975 = vpop.f32.mrb[0].mxu0
        %976 = vmatprep.mubr.bf16.mxu0 0
        %977 = vmatmul.mubr.bf16.gmra.mrb[0].mxu0 %v837
        %v978 = vpop.f32.mrb[0].mxu0
        %v979 = vadd.f32 %v862, %v978
        %v980 = vpop.f32.mrb[0].mxu0
        %v981 = vpop.f32.mrb[0].mxu0
        %v982 = vadd.f32 %v862, %v981
        %v983 = vpop.f32.mrb[0].mxu0
        %984 = vmatprep.mubr.bf16.mxu0 0
        %985 = vmatmul.mubr.bf16.gmra.mrb[0].mxu0 %v838
        %v986 = vpop.f32.mrb[0].mxu0
        %v987 = vadd.f32 %v862, %v986
        %v988 = vpop.f32.mrb[0].mxu0
        %v989 = vpop.f32.mrb[0].mxu0
        %v990 = vadd.f32 %v862, %v989
        %v991 = vpop.f32.mrb[0].mxu0
        %992 = vmatprep.mubr.bf16.mxu0 0
        %993 = vmatmul.mubr.bf16.gmra.mrb[0].mxu0 %v839
        %v994 = vpop.f32.mrb[0].mxu0
        %v995 = vadd.f32 %v862, %v994
        %v996 = vpop.f32.mrb[0].mxu0
        %v997 = vpop.f32.mrb[0].mxu0
        %v998 = vadd.f32 %v862, %v997
        %v999 = vpop.f32.mrb[0].mxu0
        %1000 = vmatprep.mubr.bf16.mxu0 0
        %1001 = vmatmul.mubr.bf16.gmra.mrb[0].mxu0 %v840
        %v1002 = vpop.f32.mrb[0].mxu0
        %v1003 = vadd.f32 %v862, %v1002
        %v1004 = vpop.f32.mrb[0].mxu0
        %v1005 = vpop.f32.mrb[0].mxu0
        %v1006 = vadd.f32 %v862, %v1005
        %v1007 = vpop.f32.mrb[0].mxu0
        %1008 = vdwg.mxu0
        %1009 = vmax.xlane.f32.xlu0 %v947
        %v1010 = vpop.xlane.xlu0 %1009
        %1011 = vmax.xlane.f32.xlu0 %v950
        %v1012 = vpop.xlane.xlu0 %1011
        %1013 = vmax.xlane.f32.xlu0 %v955
        %v1014 = vpop.xlane.xlu0 %1013
        %1015 = vmax.xlane.f32.xlu0 %v958
        %v1016 = vpop.xlane.xlu0 %1015
        %1017 = vmax.xlane.f32.xlu0 %v963
        %v1018 = vpop.xlane.xlu0 %1017
        %1019 = vmax.xlane.f32.xlu0 %v966
        %v1020 = vpop.xlane.xlu0 %1019
        %1021 = vmax.xlane.f32.xlu0 %v971
        %v1022 = vpop.xlane.xlu0 %1021
        %1023 = vmax.xlane.f32.xlu0 %v974
        %v1024 = vpop.xlane.xlu0 %1023
        %1025 = vmax.xlane.f32.xlu0 %v979
        %v1026 = vpop.xlane.xlu0 %1025
        %1027 = vmax.xlane.f32.xlu0 %v982
        %v1028 = vpop.xlane.xlu0 %1027
        %1029 = vmax.xlane.f32.xlu0 %v987
        %v1030 = vpop.xlane.xlu0 %1029
        %1031 = vmax.xlane.f32.xlu0 %v990
        %v1032 = vpop.xlane.xlu0 %1031
        %1033 = vmax.xlane.f32.xlu0 %v995
        %v1034 = vpop.xlane.xlu0 %1033
        %1035 = vmax.xlane.f32.xlu0 %v998
        %v1036 = vpop.xlane.xlu0 %1035
        %1037 = vmax.xlane.f32.xlu0 %v1003
        %v1038 = vpop.xlane.xlu0 %1037
        %1039 = vmax.xlane.f32.xlu0 %v1006
        %v1040 = vpop.xlane.xlu0 %1039
        %v1041 = vsub.f32 %v947, %v1010
        %v1042 = vsub.f32 %v950, %v1012
        %v1043 = vsub.f32 %v955, %v1014
        %v1044 = vsub.f32 %v958, %v1016
        %v1045 = vsub.f32 %v963, %v1018
        %v1046 = vsub.f32 %v966, %v1020
        %v1047 = vsub.f32 %v971, %v1022
        %v1048 = vsub.f32 %v974, %v1024
        %v1049 = vsub.f32 %v979, %v1026
        %v1050 = vsub.f32 %v982, %v1028
        %v1051 = vsub.f32 %v987, %v1030
        %v1052 = vsub.f32 %v990, %v1032
        %v1053 = vsub.f32 %v995, %v1034
        %v1054 = vsub.f32 %v998, %v1036
        %v1055 = vsub.f32 %v1003, %v1038
        %v1056 = vsub.f32 %v1006, %v1040
        %v1057 = vmul.f32 %v1041, 1.442695
        %v1058 = vpow.pop %v1057
        %v1059 = vmul.f32 %v1042, 1.442695
        %v1060 = vpow.pop %v1059
        %v1061 = vmul.f32 %v1043, 1.442695
        %v1062 = vpow.pop %v1061
        %v1063 = vmul.f32 %v1044, 1.442695
        %v1064 = vpow.pop %v1063
        %v1065 = vmul.f32 %v1045, 1.442695
        %v1066 = vpow.pop %v1065
        %v1067 = vmul.f32 %v1046, 1.442695
        %v1068 = vpow.pop %v1067
        %v1069 = vmul.f32 %v1047, 1.442695
        %v1070 = vpow.pop %v1069
        %v1071 = vmul.f32 %v1048, 1.442695
        %v1072 = vpow.pop %v1071
        %v1073 = vmul.f32 %v1049, 1.442695
        %v1074 = vpow.pop %v1073
        %v1075 = vmul.f32 %v1050, 1.442695
        %v1076 = vpow.pop %v1075
        %v1077 = vmul.f32 %v1051, 1.442695
        %v1078 = vpow.pop %v1077
        %v1079 = vmul.f32 %v1052, 1.442695
        %v1080 = vpow.pop %v1079
        %v1081 = vmul.f32 %v1053, 1.442695
        %v1082 = vpow.pop %v1081
        %v1083 = vmul.f32 %v1054, 1.442695
        %v1084 = vpow.pop %v1083
        %v1085 = vmul.f32 %v1055, 1.442695
        %v1086 = vpow.pop %v1085
        %v1087 = vmul.f32 %v1056, 1.442695
        %v1088 = vpow.pop %v1087
        %1089 = vadd.xlane.f32.xlu0 %v1058
        %v1090 = vpop.xlane.xlu0 %1089
        %1091 = vadd.xlane.f32.xlu0 %v1060
        %v1092 = vpop.xlane.xlu0 %1091
        %1093 = vadd.xlane.f32.xlu0 %v1062
        %v1094 = vpop.xlane.xlu0 %1093
        %1095 = vadd.xlane.f32.xlu0 %v1064
        %v1096 = vpop.xlane.xlu0 %1095
        %1097 = vadd.xlane.f32.xlu0 %v1066
        %v1098 = vpop.xlane.xlu0 %1097
        %1099 = vadd.xlane.f32.xlu0 %v1068
        %v1100 = vpop.xlane.xlu0 %1099
        %1101 = vadd.xlane.f32.xlu0 %v1070
        %v1102 = vpop.xlane.xlu0 %1101
        %1103 = vadd.xlane.f32.xlu0 %v1072
        %v1104 = vpop.xlane.xlu0 %1103
        %1105 = vadd.xlane.f32.xlu0 %v1074
        %v1106 = vpop.xlane.xlu0 %1105
        %1107 = vadd.xlane.f32.xlu0 %v1076
        %v1108 = vpop.xlane.xlu0 %1107
        %1109 = vadd.xlane.f32.xlu0 %v1078
        %v1110 = vpop.xlane.xlu0 %1109
        %1111 = vadd.xlane.f32.xlu0 %v1080
        %v1112 = vpop.xlane.xlu0 %1111
        %1113 = vadd.xlane.f32.xlu0 %v1082
        %v1114 = vpop.xlane.xlu0 %1113
        %1115 = vadd.xlane.f32.xlu0 %v1084
        %v1116 = vpop.xlane.xlu0 %1115
        %1117 = vadd.xlane.f32.xlu0 %v1086
        %v1118 = vpop.xlane.xlu0 %1117
        %1119 = vadd.xlane.f32.xlu0 %v1088
        %v1120 = vpop.xlane.xlu0 %1119
        %v1121 = vrcp.pop %v1090
        %v1122 = vmul.f32 %v1058, %v1121
        %v1123 = vrcp.pop %v1092
        %v1124 = vmul.f32 %v1060, %v1123
        %v1125 = vrcp.pop %v1094
        %v1126 = vmul.f32 %v1062, %v1125
        %v1127 = vrcp.pop %v1096
        %v1128 = vmul.f32 %v1064, %v1127
        %v1129 = vrcp.pop %v1098
        %v1130 = vmul.f32 %v1066, %v1129
        %v1131 = vrcp.pop %v1100
        %v1132 = vmul.f32 %v1068, %v1131
        %v1133 = vrcp.pop %v1102
        %v1134 = vmul.f32 %v1070, %v1133
        %v1135 = vrcp.pop %v1104
        %v1136 = vmul.f32 %v1072, %v1135
        %v1137 = vrcp.pop %v1106
        %v1138 = vmul.f32 %v1074, %v1137
        %v1139 = vrcp.pop %v1108
        %v1140 = vmul.f32 %v1076, %v1139
        %v1141 = vrcp.pop %v1110
        %v1142 = vmul.f32 %v1078, %v1141
        %v1143 = vrcp.pop %v1112
        %v1144 = vmul.f32 %v1080, %v1143
        %v1145 = vrcp.pop %v1114
        %v1146 = vmul.f32 %v1082, %v1145
        %v1147 = vrcp.pop %v1116
        %v1148 = vmul.f32 %v1084, %v1147
        %v1149 = vrcp.pop %v1118
        %v1150 = vmul.f32 %v1086, %v1149
        %v1151 = vrcp.pop %v1120
        %v1152 = vmul.f32 %v1088, %v1151
        %1153 = vst [vmem:[%s341] sm:$0xff] %v1122
        %1154 = vst [vmem:[%s341 + $0x8] sm:$0xff] %v1124
        %1155 = vst [vmem:[%s341 + $0x10] sm:$0xff] %v1126
        %1156 = vst [vmem:[%s341 + $0x18] sm:$0xff] %v1128
        %1157 = vst [vmem:[%s341 + $0x20] sm:$0xff] %v1130
        %1158 = vst [vmem:[%s341 + $0x28] sm:$0xff] %v1132
        %1159 = vst [vmem:[%s341 + $0x30] sm:$0xff] %v1134
        %1160 = vst [vmem:[%s341 + $0x38] sm:$0xff] %v1136
        %1161 = vst [vmem:[%s341 + $0x40] sm:$0xff] %v1138
        %1162 = vst [vmem:[%s341 + $0x48] sm:$0xff] %v1140
        %1163 = vst [vmem:[%s341 + $0x50] sm:$0xff] %v1142
        %1164 = vst [vmem:[%s341 + $0x58] sm:$0xff] %v1144
        %1165 = vst [vmem:[%s341 + $0x60] sm:$0xff] %v1146
        %1166 = vst [vmem:[%s341 + $0x68] sm:$0xff] %v1148
        %1167 = vst [vmem:[%s341 + $0x70] sm:$0xff] %v1150
        %1168 = vst [vmem:[%s341 + $0x78] sm:$0xff] %v1152
        %s1169 = sand.u32 %s186, 1
        %s1170 = scalar_lea.sflag [#allocation4], %s1169
        %s1171 = sand.u32 %s186, 1
        %s1172 = smul.addr %s1171, 128
        %s1173 = scalar_lea.vmem [#allocation10], %s1172
        // Predicated region
        $region65: #{tpu_custom_call.1} parent=47 // pred_check
          %p1174 = pneg %p196
        $region66: #{tpu_custom_call.1} parent=47 // pred_check_branch
          %1176 = sbr.rel (%p1174) target = $region68
        $region67: #{tpu_custom_call.1} parent=47 // pred_region
          %s1177 = smul.u32 16, %s26
          %s1179 = ssub.s32 2048, 2048
          %1180 = vsyncadd %s1170, %s1179
          %s1181 = smul.addr %s1177, 128
          %s1182 = scalar_lea.hbm %s7, %s1181
          %s1183 = sshll.u32 %s1173, 4
          %s1184 = int_to_ptr.vmem [resolvable:$true] %s1183
          %1189 = dma.vmem_to_hbm [thread:$0]  %s1184, 2048, %s1182, %s1170, 128, 128, 8
        $region68: #{tpu_custom_call.1} parent=47 // pred_fallthru
          _
      $region48: #{tpu_custom_call.1} parent=5 // pred_fallthru
        _
      %p1190 = scmp.le.s32.totalorder 2, %s21
      // Predicated region
      $region69: #{tpu_custom_call.1} parent=5 // pred_check
        %p1191 = pneg %p1190
      $region70: #{tpu_custom_call.1} parent=5 // pred_check_branch
        %1193 = sbr.rel (%p1191) target = $region72
      $region71: #{tpu_custom_call.1} parent=5 // pred_region
        %s1194 = ssub.s32 %s21, 2
        // Predicated region
        $region73: #{tpu_custom_call.1} parent=71 // pred_check
          %p1195 = pneg %p202
        $region74: #{tpu_custom_call.1} parent=71 // pred_check_branch
          %1197 = sbr.rel (%p1195) target = $region76
        $region75: #{tpu_custom_call.1} parent=71 // pred_region
          %s1198 = sand.u32 %s187, 1
          %s1199 = scalar_lea.sflag [#allocation4], %s1198
          %s1200 = sand.u32 %s187, 1
          %s1201 = smul.addr %s1200, 128
          %s1202 = scalar_lea.vmem [#allocation10], %s1201
          %1203 = dma.done %s1199, 2048
        $region76: #{tpu_custom_call.1} parent=71 // pred_fallthru
          _
      $region72: #{tpu_custom_call.1} parent=5 // pred_fallthru
        _
    $region6: #{tpu_custom_call.1} parent=1 // loop_footer
      %s25 = sadd.s32 1, %s21
    $region7: #{tpu_custom_call.1} parent=1 // loop_footer_branch
      %20 = sbr.rel target = $region3
    $region8: #{tpu_custom_call.1} parent=1 // loop_exit
      _
    %1204 = vsyncpa [#allocation3], 1
    %s1205 = scalar_lea.sflag [#allocation3], 1
    %1206 = vsyncpa %s1205, 1
    %1207 = vsyncpa [#allocation6], 1
    %1208 = vsyncpa [#allocation9], 1
    %1209 = vsyncpa [#allocation4], 1
    %s1210 = scalar_lea.sflag [#allocation4], 1
    %1211 = vsyncpa %s1210, 1

</llo_original>
